<compile_context>
chip_gen: v6e
topology: v6e:2x2x1
jax: 0.10.0
libtpu: 0.0.40
codegen_flags: <defaults>
</compile_context>

<pallas_src>
import math
import functools

import jax
import jax.numpy as jnp
from jax.experimental import pallas as pl
from jax.experimental.pallas import tpu as pltpu

_MIB = 1024 * 1024

_SUPPORTED_ACTIVATIONS = frozenset(
    ("", "relu", "gelu", "gelu_exact", "gelu_approx", "gelu_tanh",
     "sigmoid", "tanh", "squared_relu", "leaky_relu")
)


def _round_up(x: int, m: int) -> int:
    return ((x + m - 1) // m) * m


def _chip_generation() -> str:
    try:
        kind = jax.devices()[0].device_kind.lower()
    except Exception:
        kind = ""
    if "v5" in kind:
        return "v5"
    if "v6" in kind:
        return "v6"
    if "v7" in kind or "7x" in kind:
        return "v7"
    return "v6"  # sensible default for unknown generations


# Per-generation tile caps / VMEM budget.
#  v5e ridge ~240 FLOP/B -> 512x512 output tiles already compute-bound.
#  v6e ridge ~640 FLOP/B -> 1024x1024 output tiles (AI ~512).
#  v7x ridge ~310 FLOP/B -> 1024x1024, tk capped at 1024 and a 64 MiB VMEM.
_GEN = {
    "v5": dict(big_tm=512,  big_tn=512,  big_tk=2048, mid_align=128,
               dec_tn=2048, dec_tk=2048, vmem_fallback=128 * _MIB,
               vmem_cap=104 * _MIB, cores=1),
    "v6": dict(big_tm=1024, big_tn=1024, big_tk=2048, mid_align=256,
               dec_tn=2048, dec_tk=2048, vmem_fallback=128 * _MIB,
               vmem_cap=104 * _MIB, cores=1),
    "v7": dict(big_tm=1024, big_tn=1024, big_tk=1024, mid_align=256,
               dec_tn=2048, dec_tk=2048, vmem_fallback=64 * _MIB,
               vmem_cap=56 * _MIB, cores=2),
}


def _vmem_budget(gen: str) -> int:
    p = _GEN[gen]
    try:
        cap = int(pltpu.get_tpu_info().vmem_capacity_bytes)
    except Exception:
        cap = p["vmem_fallback"]
    # Leave headroom for Mosaic internal scratch; never exceed the per-gen cap.
    return max(32 * _MIB, min(p["vmem_cap"], cap - 8 * _MIB))


def _divisor_tile(n: int, cap: int, quantum: int = 128) -> int:
    """Largest multiple of `quantum` that divides n and is <= cap.

    `n` is always a multiple of `quantum` (packed at setup), so the forward
    pass never needs to re-pad the weight along this dimension.
    """
    if n <= cap:
        return n
    d = cap - (cap % quantum)
    while d >= quantum:
        if n % d == 0:
            return d
        d -= quantum
    return quantum


def _choose_tiles(M: int, Np: int, Kp: int, gen: str):
    p = _GEN[gen]
    if M <= 128:
        # decode / small batch: pure weight stream; big tn/tk to cut the number
        # of grid steps (per-step overhead dominates a short HBM stream).
        tm = _round_up(max(M, 16), 16)
        tn_cap, tk_cap = p["dec_tn"], p["dec_tk"]
    elif M <= 512:
        # mid batch: round tm to a full MXU pass width for this generation.
        tm = min(512, _round_up(M, p["mid_align"]))
        tn_cap, tk_cap = p["big_tn"], p["big_tk"]
    else:
        # large-M GEMM: roofline tile; shrink to an aligned divisor of M when
        # that skips the x padding copy without leaving the compute-bound regime.
        tm = p["big_tm"]
        if M % tm != 0 and M % (tm // 2) == 0:
            tm //= 2
        tn_cap, tk_cap = p["big_tn"], p["big_tk"]

    tn = _divisor_tile(Np, tn_cap)
    tk = _divisor_tile(Kp, tk_cap)

    # v7x has 2 TensorCores; only the "parallel" grid axes are sharded across
    # them, so keep their product >= the core count.
    if p["cores"] > 1:
        while (pl.cdiv(M, tm) * (Np // tn)) < p["cores"]:
            if tn >= 256 and Np % (tn // 2) == 0:
                tn //= 2
            elif tm > 16:
                tm = _round_up(tm // 2, 16)
            else:
                break
    return tm, tn, tk


def _vmem_estimate(tm, tn, tk, x_bytes, has_bias):
    est = (2 * tm * tk * x_bytes   # x tiles (double-buffered, stored dtype)
           + 2 * tk * tn * 2       # weight tiles (bf16, double-buffered)
           + 2 * tm * tn * 2       # output tiles (bf16, double-buffered)
           + tm * tn * 4)          # fp32 accumulator scratch
    if has_bias:
        est += 2 * tn * 4
    return est


def _apply_activation(x, activation):
    if activation == "":
        return x
    if activation == "relu":
        return jnp.maximum(x, 0.0)
    if activation in ("gelu", "gelu_exact"):
        # TODO(synk): original Triton fwd source not shown; assuming exact erf
        # GELU — use 'gelu_approx'/'gelu_tanh' if the Triton op used tanh form.
        return jax.nn.gelu(x, approximate=False)
    if activation in ("gelu_approx", "gelu_tanh"):
        return jax.nn.gelu(x, approximate=True)
    if activation == "sigmoid":
        return jax.nn.sigmoid(x)
    if activation == "tanh":
        return jnp.tanh(x)
    if activation == "squared_relu":
        r = jnp.maximum(x, 0.0)
        return r * r
    if activation == "leaky_relu":
        return jnp.where(x >= 0, x, 0.01 * x)
    raise ValueError(f"unsupported activation: {activation!r}")


@functools.lru_cache(maxsize=None)
def _make_kernel(activation: str, has_bias: bool):
    def kernel(*refs):
        if has_bias:
            x_ref, w_ref, b_ref, o_ref, acc_ref = refs
        else:
            x_ref, w_ref, o_ref, acc_ref = refs
            b_ref = None

        k = pl.program_id(2)

        # Per-tile half cast of the activations (matches custom_fwd cast).
        x = x_ref[...].astype(jnp.bfloat16)
        # Weight is pre-packed as (tk, tn) bf16 -> MXU-native contraction,
        # no in-kernel transpose.
        partial = jnp.dot(x, w_ref[...], preferred_element_type=jnp.float32)

        @pl.when(k == 0)
        def _():
            # First partial written directly: saves a tm*tn fp32 zero-fill.
            acc_ref[...] = partial

        @pl.when(k != 0)
        def _():
            acc_ref[...] += partial

        @pl.when(k == pl.num_programs(2) - 1)
        def _():
            acc = acc_ref[...]
            if has_bias:
                acc = acc + b_ref[...]          # fp32 bias on fp32 accumulator
            acc = _apply_activation(acc, activation)
            o_ref[...] = acc.astype(o_ref.dtype)

    return kernel


def prepare_weight(weight, bias=None):
    """One-time packing of the PyTorch-layout (out_features, in_features) weight.

    * cast to bf16 (custom_fwd half-precision semantics),
    * transpose to (K, N) so the in-kernel contraction is MXU-native,
    * pad K to a multiple of 128 and N to 512 (128 for small layers) so the
      forward pass never re-casts / re-pads / re-transposes the weight.
    """
    N, K = weight.shape
    Kp = _round_up(K, 128)
    Np = _round_up(N, 512) if N > 512 else _round_up(N, 128)
    w = jnp.asarray(weight, dtype=jnp.bfloat16).T          # (K, N)
    if (Kp, Np) != (K, N):
        w = jnp.pad(w, ((0, Kp - K), (0, Np - N)))
    b = None
    if bias is not None:
        b = jnp.asarray(bias, dtype=jnp.float32).reshape(1, N)
        if Np != N:
            b = jnp.pad(b, ((0, 0), (0, Np - N)))
    return w, b, N, K


def _linear_forward(x2d, w_kn, b_1n, N, K, activation):
    M = x2d.shape[0]
    Kp, Np = w_kn.shape
    has_bias = b_1n is not None

    gen = _chip_generation()
    budget = _vmem_budget(gen)
    tm, tn, tk = _choose_tiles(M, Np, Kp, gen)

    # Fit guard (tiles stay aligned divisors while shrinking).
    x_bytes = jnp.dtype(x2d.dtype).itemsize
    while _vmem_estimate(tm, tn, tk, x_bytes, has_bias) > 0.9 * budget and tk > 128:
        tk = _divisor_tile(Kp, max(128, tk // 2))
    while _vmem_estimate(tm, tn, tk, x_bytes, has_bias) > 0.9 * budget and tn > 128:
        tn = _divisor_tile(Np, max(128, tn // 2))

    Mp = _round_up(M, tm)
    x = x2d
    if (Mp, Kp) != (M, K):
        x = jnp.pad(x, ((0, Mp - M), (0, Kp - K)))

    grid = (Mp // tm, Np // tn, Kp // tk)

    in_specs = [
        pl.BlockSpec((tm, tk), lambda i, j, k: (i, k)),   # activations (stored dtype)
        pl.BlockSpec((tk, tn), lambda i, j, k: (k, j)),   # weight, (K, N) MXU-native
    ]
    inputs = [x, w_kn]
    if has_bias:
        in_specs.append(pl.BlockSpec((1, tn), lambda i, j, k: (0, j)))
        inputs.append(b_1n)

    kernel = _make_kernel(activation, has_bias)

    out = pl.pallas_call(
        kernel,
        out_shape=jax.ShapeDtypeStruct((Mp, Np), jnp.bfloat16),
        grid_spec=pltpu.PrefetchScalarGridSpec(
            num_scalar_prefetch=0,
            grid=grid,
            in_specs=in_specs,
            out_specs=pl.BlockSpec((tm, tn), lambda i, j, k: (i, j)),
            scratch_shapes=[pltpu.VMEM((tm, tn), jnp.float32)],
        ),
        compiler_params=pltpu.CompilerParams(
            dimension_semantics=("parallel", "parallel", "arbitrary"),
            vmem_limit_bytes=int(budget),
        ),
    )(*inputs)

    if (Mp, Np) != (M, N):
        out = out[:M, :N]
    return out


class LinearLayerPallas:
    """Forward-only TPU analogue of LinearLayerTriton2 (weight packed once)."""

    def __init__(self, weight, bias=None, activation=""):
        if activation not in _SUPPORTED_ACTIVATIONS:
            raise ValueError(f"unsupported activation: {activation!r}")
        self.activation = activation
        self.w_kn, self.b_1n, self.N, self.K = prepare_weight(weight, bias)

    def __call__(self, inp):
        lead = inp.shape[:-1]
        assert inp.shape[-1] == self.K, (
            f"input feature dim {inp.shape[-1]} != in_features {self.K}")
        M = math.prod(lead) if lead else 1
        x2d = inp.reshape(M, self.K)
        out = _linear_forward(x2d, self.w_kn, self.b_1n, self.N, self.K,
                              self.activation)
        return out.reshape(*lead, self.N)


def linear_layer_pallas(inp, weight, bias=None, activation=""):
    """One-shot functional form (re-packs the weight each call; prefer
    LinearLayerPallas for repeated use of the same layer)."""
    return LinearLayerPallas(weight, bias, activation)(inp)


def _kaiming_uniform(key, out_features, in_features, a=math.sqrt(5)):
    # Matches torch.nn.init.kaiming_uniform_(weight, a=sqrt(5)).
    gain = math.sqrt(2.0 / (1.0 + a * a))
    bound = gain * math.sqrt(3.0 / in_features)
    return jax.random.uniform(
        key, (out_features, in_features), jnp.float32, -bound, bound)


if __name__ == "__main__":
    # Small shapes consistent with a linear layer: batch=2, seq=8, hidden=32->64.
    batch, seq, in_features, out_features = 2, 8, 32, 64

    key = jax.random.PRNGKey(0)
    k_x, k_w, k_b, k_x2 = jax.random.split(key, 4)

    x = jax.random.normal(k_x, (batch, seq, in_features), jnp.float32)
    weight = _kaiming_uniform(k_w, out_features, in_features)
    b_bound = 1.0 / math.sqrt(in_features)
    bias = jax.random.uniform(k_b, (out_features,), jnp.float32, -b_bound, b_bound)

    # Pure-JAX reference with the same bf16-input / fp32-accumulate semantics.
    def ref_fn(xx, w, b, act):
        lead = xx.shape[:-1]
        r = jnp.dot(
            xx.reshape(-1, in_features).astype(jnp.bfloat16).astype(jnp.float32),
            w.T.astype(jnp.bfloat16).astype(jnp.float32))
        if b is not None:
            r = r + b.astype(jnp.float32)[None, :]
        if act == "relu":
            r = jnp.maximum(r, 0.0)
        elif act == "gelu":
            r = jax.nn.gelu(r, approximate=False)
        return r.reshape(*lead, out_features)

    # Case 1: bias + identity activation, weight packed once and reused.
    layer = LinearLayerPallas(weight, bias, activation="")
    out1 = jax.block_until_ready(layer(x))
    ref1 = ref_fn(x, weight, bias, "")
    assert out1.shape == (batch, seq, out_features)
    assert out1.dtype == jnp.bfloat16
    assert jnp.allclose(out1.astype(jnp.float32), ref1, atol=2e-2, rtol=2e-2)

    # Case 2: no bias (module default) + relu, functional one-shot form.
    out2 = jax.block_until_ready(
        linear_layer_pallas(x, weight, None, activation="relu"))
    ref2 = ref_fn(x, weight, None, "relu")
    assert jnp.allclose(out2.astype(jnp.float32), ref2, atol=2e-2, rtol=2e-2)

    # Case 3: unaligned M (seq=7) + gelu — exercises the M/K padding path.
    x3 = jax.random.normal(k_x2, (batch, 7, in_features), jnp.float32)
    out3 = jax.block_until_ready(
        linear_layer_pallas(x3, weight, bias, activation="gelu"))
    ref3 = ref_fn(x3, weight, bias, "gelu")
    assert out3.shape == (batch, 7, out_features)
    assert jnp.allclose(out3.astype(jnp.float32), ref3, atol=2e-2, rtol=2e-2)

    print("KERNEL_OK")
</pallas_src>

<mosaic_0001>
module attributes {stable_mosaic.version = 11 : i64} {
  func.func @kernel(%arg0: i32, %arg1: i32, %arg2: i32, %arg3: memref<16x128xf32, #tpu.memory_space<vmem>>, %arg4: memref<128x128xbf16, #tpu.memory_space<vmem>>, %arg5: memref<1x128xf32, #tpu.memory_space<vmem>>, %arg6: memref<16x128xbf16, #tpu.memory_space<vmem>>, %arg7: memref<16x128xf32, #tpu.memory_space<vmem>>) attributes {dimension_semantics = [#tpu.dimension_semantics<parallel>, #tpu.dimension_semantics<parallel>, #tpu.dimension_semantics<arbitrary>], iteration_bounds = array<i64: 1, 1, 1>, scalar_prefetch = 0 : i64, scratch_operands = 1 : i64, tpu.core_type = #tpu.core_type<tc>, window_params = [{transform_indices = @transform_0, window_bounds = array<i64: 16, 128>}, {transform_indices = @transform_1, window_bounds = array<i64: 128, 128>}, {transform_indices = @transform_2, window_bounds = array<i64: 1, 128>}, {transform_indices = @transform_3, window_bounds = array<i64: 16, 128>}]} {
    %c0 = arith.constant 0 : index
    %c0_0 = arith.constant 0 : index
    %0 = vector.load %arg3[%c0, %c0_0] : memref<16x128xf32, #tpu.memory_space<vmem>>, vector<16x128xf32>
    %1 = arith.truncf %0 : vector<16x128xf32> to vector<16x128xbf16>
    %c0_1 = arith.constant 0 : index
    %c0_2 = arith.constant 0 : index
    %2 = vector.load %arg4[%c0_1, %c0_2] : memref<128x128xbf16, #tpu.memory_space<vmem>>, vector<128x128xbf16>
    %cst = arith.constant dense<0.000000e+00> : vector<16x128xf32>
    %3 = tpu.matmul %1, %2, %cst {dimension_numbers = #tpu.dot_dimension_numbers<[1], [0], [0], [1], [0, 0, 1, 1], [], []>} : vector<16x128xbf16>, vector<128x128xbf16>, vector<16x128xf32> -> vector<16x128xf32>
    %c0_i32 = arith.constant 0 : i32
    %4 = arith.cmpi eq, %arg2, %c0_i32 : i32
    %5 = arith.extui %4 : i1 to i32
    %c0_i32_3 = arith.constant 0 : i32
    %6 = arith.cmpi ne, %5, %c0_i32_3 : i32
    scf.if %6 {
      %c0_8 = arith.constant 0 : index
      %c0_9 = arith.constant 0 : index
      %13 = vector.load %arg7[%c0_8, %c0_9] : memref<16x128xf32, #tpu.memory_space<vmem>>, vector<16x128xf32>
      tpu.vector_store %arg7[%c0_8, %c0_9], %3 {strides = array<i32>} : memref<16x128xf32, #tpu.memory_space<vmem>>, vector<16x128xf32>,
    } else {
    }
    %c0_i32_4 = arith.constant 0 : i32
    %7 = arith.cmpi ne, %arg2, %c0_i32_4 : i32
    %8 = arith.extui %7 : i1 to i32
    %c0_i32_5 = arith.constant 0 : i32
    %9 = arith.cmpi ne, %8, %c0_i32_5 : i32
    scf.if %9 {
      %c0_8 = arith.constant 0 : index
      %c0_9 = arith.constant 0 : index
      %13 = vector.load %arg7[%c0_8, %c0_9] : memref<16x128xf32, #tpu.memory_space<vmem>>, vector<16x128xf32>
      %14 = arith.addf %13, %3 : vector<16x128xf32>
      %c0_10 = arith.constant 0 : index
      %c0_11 = arith.constant 0 : index
      %15 = vector.load %arg7[%c0_10, %c0_11] : memref<16x128xf32, #tpu.memory_space<vmem>>, vector<16x128xf32>
      tpu.vector_store %arg7[%c0_10, %c0_11], %14 {strides = array<i32>} : memref<16x128xf32, #tpu.memory_space<vmem>>, vector<16x128xf32>,
    } else {
    }
    %c0_i32_6 = arith.constant 0 : i32
    %10 = arith.cmpi eq, %arg2, %c0_i32_6 : i32
    %11 = arith.extui %10 : i1 to i32
    %c0_i32_7 = arith.constant 0 : i32
    %12 = arith.cmpi ne, %11, %c0_i32_7 : i32
    scf.if %12 {
      %c0_8 = arith.constant 0 : index
      %c0_9 = arith.constant 0 : index
      %13 = vector.load %arg7[%c0_8, %c0_9] : memref<16x128xf32, #tpu.memory_space<vmem>>, vector<16x128xf32>
      %c0_10 = arith.constant 0 : index
      %c0_11 = arith.constant 0 : index
      %14 = vector.load %arg5[%c0_10, %c0_11] : memref<1x128xf32, #tpu.memory_space<vmem>>, vector<1x128xf32>
      %15 = vector.broadcast %14 : vector<1x128xf32> to vector<16x128xf32>
      %16 = arith.addf %13, %15 : vector<16x128xf32>
      %17 = arith.truncf %16 : vector<16x128xf32> to vector<16x128xbf16>
      %c0_12 = arith.constant 0 : index
      %c0_13 = arith.constant 0 : index
      %18 = vector.load %arg6[%c0_12, %c0_13] : memref<16x128xbf16, #tpu.memory_space<vmem>>, vector<16x128xbf16>
      tpu.vector_store %arg6[%c0_12, %c0_13], %17 {strides = array<i32>} : memref<16x128xbf16, #tpu.memory_space<vmem>>, vector<16x128xbf16>,
    } else {
    }
    return
  }
  func.func @transform_0(%arg0: i32, %arg1: i32, %arg2: i32) -> (i32, i32) {
    %c0_i32 = arith.constant 0 : i32
    return %arg0, %arg2 : i32, i32
  }
  func.func @transform_1(%arg0: i32, %arg1: i32, %arg2: i32) -> (i32, i32) {
    %c0_i32 = arith.constant 0 : i32
    return %arg2, %arg1 : i32, i32
  }
  func.func @transform_2(%arg0: i32, %arg1: i32, %arg2: i32) -> (i32, i32) {
    %c0_i32 = arith.constant 0 : i32
    %c0_i32_0 = arith.constant 0 : i32
    return %c0_i32, %arg1 : i32, i32
  }
  func.func @transform_3(%arg0: i32, %arg1: i32, %arg2: i32) -> (i32, i32) {
    %c0_i32 = arith.constant 0 : i32
    return %arg0, %arg1 : i32, i32
  }
}

</mosaic_0001>

<llo_original>
// kernel: tpu_custom_call.1
$region0: #{tpu_custom_call.1}
  #allocation0 [shape = 'u32[]', space=smem, size = 0x4, offset = 0x4, fixed_abs, tag = 'smem constant byte address 0x4 - core index']
  #allocation1 [shape = 'u32[144,128]{1,0:T(1,128)}', space=vmem, size = 0x12000, scoped, tag = 'internal scratch']
  #allocation2 [shape = 'f32[16,128]{1,0:T(8,128)}', space=vmem, size = 0x2000, scoped, tag = 'scratch operand']
  %s0 = inlined_call_operand.hbm [shape: f32[16,128], index: 0, kind: input, shape index: {}]
  %s1 = inlined_call_operand.hbm [shape: bf16[128,128], index: 1, kind: input, shape index: {}]
  %s2 = inlined_call_operand.vmem [shape: f32[1,128], index: 2, kind: input, shape index: {}]
  %s3 = inlined_call_operand.hbm [shape: bf16[16,128], index: 3, kind: output, shape index: {}]
  %s4 = sld [smem:[#allocation0]]
  $region42: #{tpu_custom_call.1} parent=0
    _
  %s6 = ssub.s32 1, %s4
  %s7 = scalar_select 0, %s6, %s4
  $region1: #{tpu_custom_call.1} parent=0
    #allocation3 [shape = 'u8[8192]{0}', space=vmem, size = 0x2000, scoped, tag = 'input window, operand 0, single buffered']
    #allocation4 [shape = 's32[1]{0}', space=sflag, size = 0x4, scoped, tag = 'scoped memory for tpu_custom_call.1']
    #allocation5 [shape = 's32[1]{0}', space=sflag, size = 0x4, scoped, tag = 'scoped memory for tpu_custom_call.1']
    #allocation6 [shape = 'u8[32768]{0}', space=vmem, size = 0x8000, scoped, tag = 'input window, operand 1, single buffered']
    #allocation7 [shape = 's32[1]{0}', space=sflag, size = 0x4, scoped, tag = 'scoped memory for tpu_custom_call.1']
    #allocation8 [shape = 'u8[4096]{0}', space=vmem, size = 0x1000, scoped, tag = 'output window, operand 0, single buffered']
    %8 = vsyncpa [#allocation4], 0
    %9 = vsyncpa [#allocation7], 0
    %10 = vsyncpa [#allocation5], 0
    // Predicated region
    $region2: #{tpu_custom_call.1} parent=1 // pred_check
      _
    $region3: #{tpu_custom_call.1} parent=1 // pred_check_branch
      %12 = sbr.rel (0) target = $region5
    $region4: #{tpu_custom_call.1} parent=1 // pred_region
      %s14 = ssub.s32 256, 256
      %15 = vsyncadd [#allocation4], %s14
      %s16 = sshll.u32 [#allocation3], 4
      %s17 = int_to_ptr.vmem [resolvable:$true] %s16
      %22 = dma.hbm_to_vmem [thread:$0]  %s0, 256, %s17, [#allocation4], 128, 128, 8
    $region5: #{tpu_custom_call.1} parent=1 // pred_fallthru
      _
    // Predicated region
    $region6: #{tpu_custom_call.1} parent=1 // pred_check
      _
    $region7: #{tpu_custom_call.1} parent=1 // pred_check_branch
      %24 = sbr.rel (0) target = $region9
    $region8: #{tpu_custom_call.1} parent=1 // pred_region
      %s26 = ssub.s32 1024, 1024
      %27 = vsyncadd [#allocation7], %s26
      %s28 = sshll.u32 [#allocation6], 4
      %s29 = int_to_ptr.vmem [resolvable:$true] %s28
      %34 = dma.hbm_to_vmem [thread:$0]  %s1, 1024, %s29, [#allocation7], 64, 64, 4
    $region9: #{tpu_custom_call.1} parent=1 // pred_fallthru
      _
    // Predicated region
    $region10: #{tpu_custom_call.1} parent=1 // pred_check
      _
    $region11: #{tpu_custom_call.1} parent=1 // pred_check_branch
      %36 = sbr.rel (0) target = $region13
    $region12: #{tpu_custom_call.1} parent=1 // pred_region
      _
    $region13: #{tpu_custom_call.1} parent=1 // pred_fallthru
      _
    // Predicated region
    $region14: #{tpu_custom_call.1} parent=1 // pred_check
      _
    $region15: #{tpu_custom_call.1} parent=1 // pred_check_branch
      %38 = sbr.rel (0) target = $region17
    $region16: #{tpu_custom_call.1} parent=1 // pred_region
      %39 = dma.done [#allocation4], 256
    $region17: #{tpu_custom_call.1} parent=1 // pred_fallthru
      _
    // Predicated region
    $region18: #{tpu_custom_call.1} parent=1 // pred_check
      _
    $region19: #{tpu_custom_call.1} parent=1 // pred_check_branch
      %41 = sbr.rel (0) target = $region21
    $region20: #{tpu_custom_call.1} parent=1 // pred_region
      %42 = dma.done [#allocation7], 1024
    $region21: #{tpu_custom_call.1} parent=1 // pred_fallthru
      _
    %v44 = vld [vmem:[#allocation3] sm:$0xff]
    %v45 = vld [vmem:[#allocation3 + $0x8] sm:$0xff]
    %v46 = vpack.c.bf16 %v45, %v44
    %v47 = vld [vmem:[#allocation6] sm:$0xf]
    %v48 = vld [vmem:[#allocation6 + $0x4] sm:$0xf]
    %v49 = vld [vmem:[#allocation6 + $0x8] sm:$0xf]
    %v50 = vld [vmem:[#allocation6 + $0xc] sm:$0xf]
    %v51 = vld [vmem:[#allocation6 + $0x10] sm:$0xf]
    %v52 = vld [vmem:[#allocation6 + $0x14] sm:$0xf]
    %v53 = vld [vmem:[#allocation6 + $0x18] sm:$0xf]
    %v54 = vld [vmem:[#allocation6 + $0x1c] sm:$0xf]
    %v55 = vld [vmem:[#allocation6 + $0x20] sm:$0xf]
    %v56 = vld [vmem:[#allocation6 + $0x24] sm:$0xf]
    %v57 = vld [vmem:[#allocation6 + $0x28] sm:$0xf]
    %v58 = vld [vmem:[#allocation6 + $0x2c] sm:$0xf]
    %v59 = vld [vmem:[#allocation6 + $0x30] sm:$0xf]
    %v60 = vld [vmem:[#allocation6 + $0x34] sm:$0xf]
    %v61 = vld [vmem:[#allocation6 + $0x38] sm:$0xf]
    %v62 = vld [vmem:[#allocation6 + $0x3c] sm:$0xf]
    %v79 = vunpack.c.l.b16 %v47
    %v80 = vunpack.c.l.b16 %v48
    %v81 = vunpack.c.l.b16 %v49
    %v82 = vunpack.c.l.b16 %v50
    %v83 = vunpack.c.l.b16 %v51
    %v84 = vunpack.c.l.b16 %v52
    %v85 = vunpack.c.l.b16 %v53
    %v86 = vunpack.c.l.b16 %v54
    %v87 = vunpack.c.l.b16 %v55
    %v88 = vunpack.c.l.b16 %v56
    %v89 = vunpack.c.l.b16 %v57
    %v90 = vunpack.c.l.b16 %v58
    %v91 = vunpack.c.l.b16 %v59
    %v92 = vunpack.c.l.b16 %v60
    %v93 = vunpack.c.l.b16 %v61
    %v94 = vunpack.c.l.b16 %v62
    %v95 = vpack.c.b16 %v80, %v79
    %v96 = vpack.c.b16 %v82, %v81
    %v97 = vpack.c.b16 %v84, %v83
    %v98 = vpack.c.b16 %v86, %v85
    %v99 = vpack.c.b16 %v88, %v87
    %v100 = vpack.c.b16 %v90, %v89
    %v101 = vpack.c.b16 %v92, %v91
    %v102 = vpack.c.b16 %v94, %v93
    %111 = vmatprep.subr.bf16.mxu0 0
    %112 = vmatpush1.bf16.msra.mxu0 %v102
    %113 = vmatprep.subr.bf16.mxu0 0
    %114 = vmatpush1.bf16.msra.mxu0 %v101
    %115 = vmatprep.subr.bf16.mxu0 0
    %116 = vmatpush1.bf16.msra.mxu0 %v100
    %117 = vmatprep.subr.bf16.mxu0 0
    %118 = vmatpush1.bf16.msra.mxu0 %v99
    %119 = vmatprep.subr.bf16.mxu0 0
    %120 = vmatpush1.bf16.msra.mxu0 %v98
    %121 = vmatprep.subr.bf16.mxu0 0
    %122 = vmatpush1.bf16.msra.mxu0 %v97
    %123 = vmatprep.subr.bf16.mxu0 0
    %124 = vmatpush1.bf16.msra.mxu0 %v96
    %125 = vmatprep.subr.bf16.mxu0 0
    %126 = vmatpush1.bf16.msra.mxu0 %v95
    %127 = vmatprep.subr.bf16.mxu0 0
    %128 = vmatpush2.bf16.msra.mxu0 0
    %129 = vmatprep.subr.bf16.mxu0 0
    %130 = vmatpush2.bf16.msra.mxu0 0
    %131 = vmatprep.subr.bf16.mxu0 0
    %132 = vmatpush2.bf16.msra.mxu0 0
    %133 = vmatprep.subr.bf16.mxu0 0
    %134 = vmatpush2.bf16.msra.mxu0 0
    %135 = vmatprep.subr.bf16.mxu0 0
    %136 = vmatpush2.bf16.msra.mxu0 0
    %137 = vmatprep.subr.bf16.mxu0 0
    %138 = vmatpush2.bf16.msra.mxu0 0
    %139 = vmatprep.subr.bf16.mxu0 0
    %140 = vmatpush2.bf16.msra.mxu0 0
    %141 = vmatprep.subr.bf16.mxu0 0
    %142 = vmatpush2.bf16.msra.mxu0 0
    %143 = vmatprep.mubr.bf16.mxu0 0
    %144 = vmatmul.mubr.bf16.gmra.mxu0 %v46
    %v145 = vpop.f32.mrf.mxu0
    %v146 = vadd.f32 0.0, %v145
    %v147 = vpop.f32.mrf.mxu0
    %v148 = vpop.f32.mrf.mxu0
    %v149 = vadd.f32 0.0, %v148
    %v150 = vpop.f32.mrf.mxu0
    %151 = vdwg.mxu0
    %p152 = scmp.eq.s32.totalorder 0, 0
    // Predicated region
    $region22: #{tpu_custom_call.1} parent=1 // pred_check
      %p153 = pneg %p152
    $region23: #{tpu_custom_call.1} parent=1 // pred_check_branch
      %155 = sbr.rel (%p153) target = $region25
    $region24: #{tpu_custom_call.1} parent=1 // pred_region
      %156 = vst [vmem:[#allocation2] sm:$0xff] %v146
      %157 = vst [vmem:[#allocation2 + $0x8] sm:$0xff] %v149
    $region25: #{tpu_custom_call.1} parent=1 // pred_fallthru
      _
    %p158 = scmp.ne.s32.totalorder 0, 0
    // Predicated region
    $region26: #{tpu_custom_call.1} parent=1 // pred_check
      %p159 = pneg %p158
    $region27: #{tpu_custom_call.1} parent=1 // pred_check_branch
      %161 = sbr.rel (%p159) target = $region29
    $region28: #{tpu_custom_call.1} parent=1 // pred_region
      %v162 = vld [vmem:[#allocation2] sm:$0xff]
      %v163 = vld [vmem:[#allocation2 + $0x8] sm:$0xff]
      %v164 = vadd.f32 %v162, %v146
      %v165 = vadd.f32 %v163, %v149
      %166 = vst [vmem:[#allocation2] sm:$0xff] %v164
      %167 = vst [vmem:[#allocation2 + $0x8] sm:$0xff] %v165
    $region29: #{tpu_custom_call.1} parent=1 // pred_fallthru
      _
    // Predicated region
    $region30: #{tpu_custom_call.1} parent=1 // pred_check
      %p168 = pneg %p152
    $region31: #{tpu_custom_call.1} parent=1 // pred_check_branch
      %170 = sbr.rel (%p168) target = $region33
    $region32: #{tpu_custom_call.1} parent=1 // pred_region
      %v171 = vld [vmem:[#allocation2] sm:$0xff]
      %v172 = vld [vmem:[#allocation2 + $0x8] sm:$0xff]
      %v173 = vld [vmem:[%s2] sm:$0x1]
      %v175 = vlaneseq
      %v176 = vshrl.u32 %v175, 7
      %v177 = vsub.s32 0, %v176
      %v178 = vrot.slane %v173, %v177
      %v180 = vadd.f32 %v171, %v178
      %v181 = vadd.f32 %v172, %v178
      %v182 = vpack.c.bf16 %v181, %v180
      %v184 = vunpack.c.l.b16 %v182
      %v185 = vunpack.c.h.b16 %v182
      %v186 = vpack.c.b16 %v184, %v184
      %v187 = vpack.c.b16 %v185, %v185
      %190 = vst [vmem:[#allocation8] sm:$0xf] %v186
      %191 = vst [vmem:[#allocation8 + $0x4] sm:$0xf] %v187
    $region33: #{tpu_custom_call.1} parent=1 // pred_fallthru
      _
    // Predicated region
    $region34: #{tpu_custom_call.1} parent=1 // pred_check
      _
    $region35: #{tpu_custom_call.1} parent=1 // pred_check_branch
      %193 = sbr.rel (0) target = $region37
    $region36: #{tpu_custom_call.1} parent=1 // pred_region
      %s195 = ssub.s32 128, 128
      %196 = vsyncadd [#allocation5], %s195
      %s197 = sshll.u32 [#allocation8], 4
      %s198 = int_to_ptr.vmem [resolvable:$true] %s197
      %203 = dma.vmem_to_hbm [thread:$0]  %s198, 128, %s3, [#allocation5], 64, 64, 4
    $region37: #{tpu_custom_call.1} parent=1 // pred_fallthru
      _
    // Predicated region
    $region38: #{tpu_custom_call.1} parent=1 // pred_check
      _
    $region39: #{tpu_custom_call.1} parent=1 // pred_check_branch
      %205 = sbr.rel (0) target = $region41
    $region40: #{tpu_custom_call.1} parent=1 // pred_region
      %206 = dma.done [#allocation5], 128
    $region41: #{tpu_custom_call.1} parent=1 // pred_fallthru
      _
    %207 = vsyncpa [#allocation4], 1
    %208 = vsyncpa [#allocation7], 1
    %209 = vsyncpa [#allocation5], 1

</llo_original>
